<compile_context>
chip_gen: v7x
topology: tpu7x:2x2x1
jax: 0.10.0
libtpu: 0.0.40
codegen_flags: <defaults>
</compile_context>

<pallas_src>
import functools
import math

import jax
import jax.numpy as jnp
from jax import lax
from jax.experimental import pallas as pl
from jax.experimental.pallas import tpu as pltpu


_MiB = 1024 * 1024
# Largest vocabulary for which the one-hot MXU gather is used; above this the
# (T, V) one-hot and the T*V*D matmul flops stop being "free" and the
# row-copy loop wins.
_ONEHOT_MAX_V = 2048
# Rows gathered per grid step on the HBM (table-does-not-fit-VMEM) fallback.
_HBM_ROWS_PER_STEP = 16


def _round_up(x, m):
    return ((x + m - 1) // m) * m


def _vmem_capacity_bytes():
    """Per-core VMEM capacity (v5e/v6e: 128 MiB, v7x: 64 MiB per TensorCore)."""
    try:
        cap = int(pltpu.get_tpu_info().vmem_capacity_bytes)
        if cap >= 16 * _MiB:
            return cap
    except Exception:
        pass
    return 64 * _MiB  # conservative default (v7x per-TensorCore size)


def _vmem_limit_bytes(cap, need):
    need = int(need) + 4 * _MiB          # headroom for compiler-internal scratch
    return int(max(32 * _MiB, min(need, int(cap * 0.9))))


# ----------------------------------------------------------------------------
# Fast path: VMEM-resident table + vectorized one-hot MXU gather.
# ----------------------------------------------------------------------------
def _embed_onehot_kernel(ids_ref, table_ref, out_ref, *, scale):
    # ids_ref   : (T, 1) int32 VMEM block of token ids for this tile
    # table_ref : (V, D) embedding table, VMEM-resident (constant index_map)
    # out_ref   : (T, D) lane/sublane-dense output tile
    ids = ids_ref[...]                                        # (T, 1)
    t_tokens = ids_ref.shape[0]
    vocab = table_ref.shape[0]
    pos = lax.broadcasted_iota(jnp.int32, (t_tokens, vocab), 1)
    # Exact gather: one-hot of 1.0 (f32) x f32 table, accumulated in f32 --
    # each output row is exactly 1.0 * table[row].
    one_hot = jnp.where(pos == ids, 1.0, 0.0).astype(table_ref.dtype)
    gathered = jnp.dot(one_hot, table_ref[...],
                       preferred_element_type=jnp.float32)
    # Scale the register-resident f32 result once, just before the single
    # dense store (no second read-modify-write pass over the output tile).
    out_ref[...] = (gathered * scale).astype(out_ref.dtype)


def _embedding_resident_onehot(ids, table, scale, cap):
    n_tokens = ids.shape[0]
    vocab, d = table.shape
    itemsize = jnp.dtype(table.dtype).itemsize

    # Tile: as big as useful (amortizes ~0.35us per grid step; multiple of 256
    # for the MXU when large), bounded so the (T, V) one-hot stays <= ~2 MiB.
    tile = min(512, max(8, (2 * _MiB // max(4 * vocab, 1)) // 8 * 8))
    tile = min(tile, _round_up(n_tokens, 8))
    tile = max(8, (tile // 8) * 8)
    n_tiles = pl.cdiv(n_tokens, tile)
    n_pad = n_tiles * tile

    ids2 = ids.reshape(n_tokens, 1)
    if n_pad != n_tokens:
        ids2 = jnp.pad(ids2, ((0, n_pad - n_tokens), (0, 0)))

    need = (2 * vocab * d * itemsize          # double-buffered resident table
            + 2 * tile * d * itemsize         # double-buffered output tile
            + 2 * tile * 4                    # ids tiles
            + 2 * tile * vocab * 4)           # one-hot intermediate
    out = pl.pallas_call(
        functools.partial(_embed_onehot_kernel, scale=scale),
        out_shape=jax.ShapeDtypeStruct((n_pad, d), table.dtype),
        grid=(n_tiles,),
        in_specs=[
            pl.BlockSpec((tile, 1), lambda i: (i, 0)),      # per-tile ids (VMEM)
            pl.BlockSpec((vocab, d), lambda i: (0, 0)),     # whole table, DMA'd once
        ],
        out_specs=pl.BlockSpec((tile, d), lambda i: (i, 0)),
        compiler_params=pltpu.CompilerParams(
            dimension_semantics=("parallel",),              # v7x: 2 TCs split tiles
            vmem_limit_bytes=_vmem_limit_bytes(cap, need),
        ),
        cost_estimate=pl.CostEstimate(
            flops=2 * n_pad * vocab * d + n_pad * d,
            transcendentals=0,
            bytes_accessed=(vocab * d + n_pad * d) * itemsize + n_pad * 4,
        ),
    )(ids2, table)
    # Only pay the extra HBM copy of the slice when padding was actually used.
    return out if n_pad == n_tokens else out[:n_tokens]


# ----------------------------------------------------------------------------
# Medium path: VMEM-resident table, large vocab -> unrolled row-copy loop with
# the scale fused into each per-row copy.
# ----------------------------------------------------------------------------
def _embed_rowcopy_kernel(ids_ref, table_ref, out_ref, *, scale, tile_tokens):
    # ids_ref   : (N_pad,) int32 in SMEM (scalar prefetch; used for addressing)
    # table_ref : (V, D) VMEM-resident table
    # out_ref   : (T, D) output tile
    base = pl.program_id(0) * tile_tokens

    def body(t, carry):
        row = ids_ref[base + t]
        out_ref[pl.ds(t, 1), :] = (
            table_ref[pl.ds(row, 1), :].astype(jnp.float32) * scale
        ).astype(out_ref.dtype)
        return carry

    lax.fori_loop(0, tile_tokens, body, 0, unroll=8)


def _embedding_resident_rowcopy(ids, table, scale, cap):
    n_tokens = ids.shape[0]
    vocab, d = table.shape
    itemsize = jnp.dtype(table.dtype).itemsize

    tile = min(512, _round_up(n_tokens, 8))
    tile = max(8, (tile // 8) * 8)
    n_tiles = pl.cdiv(n_tokens, tile)
    n_pad = n_tiles * tile
    ids_pad = ids if n_pad == n_tokens else jnp.pad(ids, (0, n_pad - n_tokens))

    need = 2 * vocab * d * itemsize + 2 * tile * d * itemsize
    out = pl.pallas_call(
        functools.partial(_embed_rowcopy_kernel, scale=scale, tile_tokens=tile),
        out_shape=jax.ShapeDtypeStruct((n_pad, d), table.dtype),
        grid_spec=pltpu.PrefetchScalarGridSpec(
            num_scalar_prefetch=1,
            grid=(n_tiles,),
            in_specs=[pl.BlockSpec((vocab, d), lambda i, ids_smem: (0, 0))],
            out_specs=pl.BlockSpec((tile, d), lambda i, ids_smem: (i, 0)),
        ),
        compiler_params=pltpu.CompilerParams(
            dimension_semantics=("parallel",),
            vmem_limit_bytes=_vmem_limit_bytes(cap, need),
        ),
        cost_estimate=pl.CostEstimate(
            flops=n_pad * d,
            transcendentals=0,
            bytes_accessed=(vocab * d + n_pad * d) * itemsize + n_pad * 4),
    )(ids_pad, table)
    return out if n_pad == n_tokens else out[:n_tokens]


# ----------------------------------------------------------------------------
# Fallback: table too large for VMEM -> batched manual row DMAs from HBM.
# ----------------------------------------------------------------------------
def _embed_hbm_gather_kernel(ids_ref, table_hbm, out_ref, buf, sems, *,
                             scale, rows):
    # ids_ref   : (N_pad,) int32 in SMEM (scalar prefetch)
    # table_hbm : (V, D) embedding table left in HBM (memory_space=pl.ANY)
    # out_ref   : (rows, D) dense output slab for this step
    # buf       : (rows, D) VMEM staging buffer; sems: per-row DMA semaphores
    base = pl.program_id(0) * rows
    copies = []
    for r in range(rows):                 # static: all row DMAs in flight at once
        row = ids_ref[base + r]
        cp = pltpu.make_async_copy(table_hbm.at[pl.ds(row, 1), :],
                                   buf.at[pl.ds(r, 1), :],
                                   sems.at[r])
        cp.start()
        copies.append(cp)
    for cp in copies:
        cp.wait()
    out_ref[...] = (buf[...].astype(jnp.float32) * scale).astype(out_ref.dtype)


def _embedding_hbm_gather(ids, table, scale):
    n_tokens = ids.shape[0]
    vocab, d = table.shape
    itemsize = jnp.dtype(table.dtype).itemsize
    rows = _HBM_ROWS_PER_STEP
    n_pad = _round_up(n_tokens, rows)
    ids_pad = ids if n_pad == n_tokens else jnp.pad(ids, (0, n_pad - n_tokens))

    out = pl.pallas_call(
        functools.partial(_embed_hbm_gather_kernel, scale=scale, rows=rows),
        out_shape=jax.ShapeDtypeStruct((n_pad, d), table.dtype),
        grid_spec=pltpu.PrefetchScalarGridSpec(
            num_scalar_prefetch=1,
            grid=(n_pad // rows,),
            in_specs=[pl.BlockSpec(memory_space=pl.ANY)],
            out_specs=pl.BlockSpec((rows, d), lambda i, ids_smem: (i, 0)),
            scratch_shapes=[pltpu.VMEM((rows, d), table.dtype),
                            pltpu.SemaphoreType.DMA((rows,))],
        ),
        compiler_params=pltpu.CompilerParams(
            dimension_semantics=("arbitrary",)),
        cost_estimate=pl.CostEstimate(
            flops=n_pad * d,
            transcendentals=0,
            bytes_accessed=2 * n_pad * d * itemsize + n_pad * 4),
    )(ids_pad, table)
    return out if n_pad == n_tokens else out[:n_tokens]


# ----------------------------------------------------------------------------
# Public wrapper (matches the PyTorch module's forward semantics).
# ----------------------------------------------------------------------------
def embedding_forward(x, table, d_embed=None, *, gather_mode=None):
    """x: (B, S) int token ids, table: (V, D) -> (B, S, D) = table[x]*sqrt(D)."""
    b, s = x.shape
    vocab, d = table.shape
    if d_embed is None:
        d_embed = d
    assert d_embed == d, "d_embed must equal the embedding table width"
    scale = float(math.sqrt(d_embed))

    # NOTE: out-of-range ids are clamped to [0, V-1]; PyTorch nn.Embedding
    # would raise instead. Padded tokens gather row 0 and are sliced off.
    ids = jnp.clip(x.reshape(b * s).astype(jnp.int32), 0, vocab - 1)

    itemsize = jnp.dtype(table.dtype).itemsize
    table_bytes = vocab * d * itemsize
    cap = _vmem_capacity_bytes()
    # The resident table block is double-buffered by the pipeline, so budget
    # ~0.35 * capacity: ~44 MiB on v5e/v6e (128 MiB VMEM), ~22 MiB per
    # TensorCore on v7x (64 MiB/TC; each core keeps its own copy under
    # ("parallel",) grid semantics).
    resident_budget = int(0.35 * cap)

    if gather_mode is None:
        if table_bytes <= resident_budget:
            gather_mode = "onehot" if vocab <= _ONEHOT_MAX_V else "rowcopy"
        else:
            gather_mode = "dma"

    if gather_mode == "onehot":
        out_flat = _embedding_resident_onehot(ids, table, scale, cap)
    elif gather_mode == "rowcopy":
        out_flat = _embedding_resident_rowcopy(ids, table, scale, cap)
    elif gather_mode == "dma":
        out_flat = _embedding_hbm_gather(ids, table, scale)
    else:
        raise ValueError(f"unknown gather_mode: {gather_mode}")
    return out_flat.reshape(b, s, d)


if __name__ == "__main__":
    # Small, deterministic setup consistent with Embedding(d_embed, vocab).
    VOCAB_SIZE = 64      # len(vocab)
    D_EMBED = 128        # d_embed
    B, S = 2, 8          # batch of token-id sequences

    key = jax.random.PRNGKey(0)
    k_tab, k_ids = jax.random.split(key)

    # nn.Embedding default init: weight ~ N(0, 1), shape (num_embeddings, d_embed)
    table = jax.random.normal(k_tab, (VOCAB_SIZE, D_EMBED), dtype=jnp.float32)
    x = jax.random.randint(k_ids, (B, S), 0, VOCAB_SIZE, dtype=jnp.int32)

    ref = table[x] * math.sqrt(D_EMBED)

    # Default path: VMEM-resident table + one-hot MXU gather.
    out = embedding_forward(x, table, D_EMBED)
    out = jax.block_until_ready(out)
    assert out.shape == (B, S, D_EMBED), out.shape
    assert jnp.allclose(out, ref, atol=1e-5, rtol=1e-5), "one-hot path mismatch"

    # Also exercise the large-vocab resident path (fused-scale row copy).
    out2 = embedding_forward(x, table, D_EMBED, gather_mode="rowcopy")
    out2 = jax.block_until_ready(out2)
    assert jnp.allclose(out2, ref, atol=1e-6, rtol=1e-6), "row-copy path mismatch"

    print("KERNEL_OK")
</pallas_src>

<mosaic_0001>
module attributes {stable_mosaic.version = 11 : i64} {
  func.func @_embed_onehot_kernel(%arg0: i32, %arg1: memref<16x1xi32, #tpu.memory_space<vmem>>, %arg2: memref<64x128xf32, #tpu.memory_space<vmem>>, %arg3: memref<16x128xf32, #tpu.memory_space<vmem>>) attributes {dimension_semantics = [#tpu.dimension_semantics<parallel>], iteration_bounds = array<i64: 1>, scalar_prefetch = 0 : i64, scratch_operands = 0 : i64, tpu.core_type = #tpu.core_type<tc>, window_params = [{transform_indices = @transform_0, window_bounds = array<i64: 16, 1>}, {pipeline_mode = #tpu.pipeline_mode<synchronous>, transform_indices = @transform_1, window_bounds = array<i64: 64, 128>}, {transform_indices = @transform_2, window_bounds = array<i64: 16, 128>}]} {
    %c0 = arith.constant 0 : index
    %c0_0 = arith.constant 0 : index
    %0 = vector.load %arg1[%c0, %c0_0] : memref<16x1xi32, #tpu.memory_space<vmem>>, vector<16x1xi32>
    %1 = tpu.iota {dimensions = array<i32: 1>} : vector<16x64xi32>
    %2 = vector.broadcast %0 : vector<16x1xi32> to vector<16x64xi32>
    %3 = arith.cmpi eq, %1, %2 : vector<16x64xi32>
    %cst = arith.constant 1.000000e+00 : f32
    %cst_1 = arith.constant 0.000000e+00 : f32
    %4 = vector.broadcast %cst : f32 to vector<16x64xf32>
    %5 = vector.broadcast %cst_1 : f32 to vector<16x64xf32>
    %6 = arith.select %3, %4, %5 : vector<16x64xi1>, vector<16x64xf32>
    %c0_2 = arith.constant 0 : index
    %c0_3 = arith.constant 0 : index
    %7 = vector.load %arg2[%c0_2, %c0_3] : memref<64x128xf32, #tpu.memory_space<vmem>>, vector<64x128xf32>
    %cst_4 = arith.constant dense<0.000000e+00> : vector<16x128xf32>
    %8 = tpu.matmul %6, %7, %cst_4 {dimension_numbers = #tpu.dot_dimension_numbers<[1], [0], [0], [1], [0, 0, 1, 1], [], []>} : vector<16x64xf32>, vector<64x128xf32>, vector<16x128xf32> -> vector<16x128xf32>
    %cst_5 = arith.constant 11.3137083 : f32
    %9 = vector.broadcast %cst_5 : f32 to vector<16x128xf32>
    %10 = arith.mulf %8, %9 : vector<16x128xf32>
    %c0_6 = arith.constant 0 : index
    %c0_7 = arith.constant 0 : index
    %11 = vector.load %arg3[%c0_6, %c0_7] : memref<16x128xf32, #tpu.memory_space<vmem>>, vector<16x128xf32>
    tpu.vector_store %arg3[%c0_6, %c0_7], %10 {strides = array<i32>} : memref<16x128xf32, #tpu.memory_space<vmem>>, vector<16x128xf32>,
    return
  }
  func.func @transform_0(%arg0: i32) -> (i32, i32) {
    %c0_i32 = arith.constant 0 : i32
    %c0_i32_0 = arith.constant 0 : i32
    return %arg0, %c0_i32 : i32, i32
  }
  func.func @transform_1(%arg0: i32) -> (i32, i32) {
    %c0_i32 = arith.constant 0 : i32
    %c0_i32_0 = arith.constant 0 : i32
    %c0_i32_1 = arith.constant 0 : i32
    return %c0_i32, %c0_i32_0 : i32, i32
  }
  func.func @transform_2(%arg0: i32) -> (i32, i32) {
    %c0_i32 = arith.constant 0 : i32
    %c0_i32_0 = arith.constant 0 : i32
    return %arg0, %c0_i32 : i32, i32
  }
}

</mosaic_0001>

<llo_original>
// kernel: tpu_custom_call.1
$region0: #{tpu_custom_call.1}
  #allocation0 [shape = 'u32[]', space=smem, size = 0x4, offset = 0x4, fixed_abs, tag = 'smem constant byte address 0x4 - core index']
  #allocation1 [shape = 'u32[144,128]{1,0:T(1,128)}', space=vmem, size = 0x12000, scoped, tag = 'internal scratch']
  %s0 = inlined_call_operand.vmem [shape: s32[16,1], index: 0, kind: input, shape index: {}]
  %s1 = inlined_call_operand.hbm [shape: f32[64,128], index: 1, kind: input, shape index: {}]
  %s2 = inlined_call_operand.hbm [shape: f32[16,128], index: 2, kind: output, shape index: {}]
  %s3 = sld [smem:[#allocation0]]
  $region22: #{tpu_custom_call.1} parent=0
    _
  %s5 = ssub.s32 1, %s3
  %s6 = scalar_select 0, %s5, %s3
  $region1: #{tpu_custom_call.1} parent=0
    #allocation2 [shape = 'u8[32768]{0}', space=vmem, size = 0x8000, scoped, tag = 'input window, operand 1, single buffered']
    #allocation3 [shape = 's32[1]{0}', space=sflag, size = 0x4, scoped, tag = 'scoped memory for tpu_custom_call.1']
    #allocation4 [shape = 's32[1]{0}', space=sflag, size = 0x4, scoped, tag = 'scoped memory for tpu_custom_call.1']
    #allocation5 [shape = 'u8[8192]{0}', space=vmem, size = 0x2000, scoped, tag = 'output window, operand 0, single buffered']
    %7 = vsyncpa [#allocation3], 0
    %8 = vsyncpa [#allocation4], 0
    // Predicated region
    $region2: #{tpu_custom_call.1} parent=1 // pred_check
      _
    $region3: #{tpu_custom_call.1} parent=1 // pred_check_branch
      %10 = sbr.rel (0) target = $region5
    $region4: #{tpu_custom_call.1} parent=1 // pred_region
      _
    $region5: #{tpu_custom_call.1} parent=1 // pred_fallthru
      _
    // Predicated region
    $region6: #{tpu_custom_call.1} parent=1 // pred_check
      _
    $region7: #{tpu_custom_call.1} parent=1 // pred_check_branch
      %12 = sbr.rel (0) target = $region9
    $region8: #{tpu_custom_call.1} parent=1 // pred_region
      %s14 = ssub.s32 1024, 1024
      %15 = vsyncadd [#allocation3], %s14
      %s16 = sshll.u32 [#allocation2], 4
      %s17 = int_to_ptr.vmem [resolvable:$true] %s16
      %22 = dma.hbm_to_vmem [thread:$0]  %s1, 1024, %s17, [#allocation3], 128, 128, 8
    $region9: #{tpu_custom_call.1} parent=1 // pred_fallthru
      _
    // Predicated region
    $region10: #{tpu_custom_call.1} parent=1 // pred_check
      _
    $region11: #{tpu_custom_call.1} parent=1 // pred_check_branch
      %24 = sbr.rel (0) target = $region13
    $region12: #{tpu_custom_call.1} parent=1 // pred_region
      %25 = dma.done [#allocation3], 1024
    $region13: #{tpu_custom_call.1} parent=1 // pred_fallthru
      _
    %v26 = vld [vmem:[%s0] sm:$0xff]
    %v27 = vld [vmem:[%s0 + $0x8] sm:$0xff]
    %v28 = vlaneseq
    %v29 = vand.u32 %v28, 127
    %30 = vset.pattern.permute.xlu0 0
    %31 = vperm.xlu0 %30, %v26
    %v32 = vpop.permute.xlu0 %31
    %33 = vset.pattern.permute.xlu0 0
    %34 = vperm.xlu0 %33, %v27
    %v35 = vpop.permute.xlu0 %34
    %vm36 = vcmp.eq.s32.totalorder %v29, %v32
    %vm37 = vcmp.eq.s32.totalorder %v29, %v35
    %v38 = vsel %vm36, 1.0, 0.0
    %v39 = vsel %vm37, 1.0, 0.0
    %v40 = vld [vmem:[#allocation2] sm:$0xff]
    %v41 = vld [vmem:[#allocation2 + $0x8] sm:$0xff]
    %v42 = vld [vmem:[#allocation2 + $0x10] sm:$0xff]
    %v43 = vld [vmem:[#allocation2 + $0x18] sm:$0xff]
    %v44 = vld [vmem:[#allocation2 + $0x20] sm:$0xff]
    %v45 = vld [vmem:[#allocation2 + $0x28] sm:$0xff]
    %v46 = vld [vmem:[#allocation2 + $0x30] sm:$0xff]
    %v47 = vld [vmem:[#allocation2 + $0x38] sm:$0xff]
    %vm48 = vcmask 523264
    %v50 = vsel %vm48, %v38, 0
    %v53 = vsel %vm48, %v39, 0
    %55 = vmatprep.subr.mxu0 0.0
    %56 = vmatpush1.msra.mxu0 %v40
    %57 = vmatprep.subr.mxu0 0.0
    %58 = vmatpush1.msra.mxu0 %v41
    %59 = vmatprep.subr.mxu0 0.0
    %60 = vmatpush1.msra.mxu0 %v42
    %61 = vmatprep.subr.mxu0 0.0
    %62 = vmatpush1.msra.mxu0 %v43
    %63 = vmatprep.subr.mxu0 0.0
    %64 = vmatpush1.msra.mxu0 %v44
    %65 = vmatprep.subr.mxu0 0.0
    %66 = vmatpush1.msra.mxu0 %v45
    %67 = vmatprep.subr.mxu0 0.0
    %68 = vmatpush1.msra.mxu0 %v46
    %69 = vmatprep.subr.mxu0 0.0
    %70 = vmatpush1.msra.mxu0 %v47
    %71 = vmatprep.subr.mxu0 0.0
    %72 = vmatpush1.msra.mxu0 0.0
    %73 = vmatprep.subr.mxu0 0.0
    %74 = vmatpush1.msra.mxu0 0.0
    %75 = vmatprep.subr.mxu0 0.0
    %76 = vmatpush1.msra.mxu0 0.0
    %77 = vmatprep.subr.mxu0 0.0
    %78 = vmatpush1.msra.mxu0 0.0
    %79 = vmatprep.subr.mxu0 0.0
    %80 = vmatpush1.msra.mxu0 0.0
    %81 = vmatprep.subr.mxu0 0.0
    %82 = vmatpush1.msra.mxu0 0.0
    %83 = vmatprep.subr.mxu0 0.0
    %84 = vmatpush1.msra.mxu0 0.0
    %85 = vmatprep.subr.mxu0 0.0
    %86 = vmatpush1.msra.mxu0 0.0
    %87 = vmatprep.subr.mxu0 0.0
    %88 = vmatpush1.msra.mxu0 0.0
    %89 = vmatprep.subr.mxu0 0.0
    %90 = vmatpush1.msra.mxu0 0.0
    %91 = vmatprep.subr.mxu0 0.0
    %92 = vmatpush1.msra.mxu0 0.0
    %93 = vmatprep.subr.mxu0 0.0
    %94 = vmatpush1.msra.mxu0 0.0
    %95 = vmatprep.subr.mxu0 0.0
    %96 = vmatpush1.msra.mxu0 0.0
    %97 = vmatprep.subr.mxu0 0.0
    %98 = vmatpush1.msra.mxu0 0.0
    %99 = vmatprep.subr.mxu0 0.0
    %100 = vmatpush1.msra.mxu0 0.0
    %101 = vmatprep.subr.mxu0 0.0
    %102 = vmatpush1.msra.mxu0 0.0
    %103 = vmatprep.subr.mxu0 0.0
    %104 = vmatpush1.msra.mxu0 0.0
    %105 = vmatprep.subr.mxu0 0.0
    %106 = vmatpush1.msra.mxu0 0.0
    %107 = vmatprep.subr.mxu0 0.0
    %108 = vmatpush1.msra.mxu0 0.0
    %109 = vmatprep.subr.mxu0 0.0
    %110 = vmatpush1.msra.mxu0 0.0
    %111 = vmatprep.subr.mxu0 0.0
    %112 = vmatpush1.msra.mxu0 0.0
    %113 = vmatprep.subr.mxu0 0.0
    %114 = vmatpush1.msra.mxu0 0.0
    %115 = vmatprep.subr.mxu0 0.0
    %116 = vmatpush1.msra.mxu0 0.0
    %117 = vmatprep.subr.mxu0 0.0
    %118 = vmatpush1.msra.mxu0 0.0
    %119 = vmatprep.mubr.f32.mxu0 0.0
    %120 = vmatmul.mubr.f32.gmra.mrb[0].mxu0 %v50
    %v121 = vpop.f32.mrb[0].mxu0
    %v122 = vadd.f32 0.0, %v121
    %v123 = vpop.f32.mrb[0].mxu0
    %124 = vmatprep.mubr.f32.mxu0 0.0
    %125 = vmatmul.mubr.f32.gmra.mrb[0].mxu0 %v53
    %v126 = vpop.f32.mrb[0].mxu0
    %v127 = vadd.f32 0.0, %v126
    %v128 = vpop.f32.mrb[0].mxu0
    %129 = vdwg.mxu0
    %v130 = vmul.f32 %v122, 11.313708
    %v131 = vmul.f32 %v127, 11.313708
    %132 = vst [vmem:[#allocation5] sm:$0xff] %v130
    %133 = vst [vmem:[#allocation5 + $0x8] sm:$0xff] %v131
    // Predicated region
    $region14: #{tpu_custom_call.1} parent=1 // pred_check
      _
    $region15: #{tpu_custom_call.1} parent=1 // pred_check_branch
      %135 = sbr.rel (0) target = $region17
    $region16: #{tpu_custom_call.1} parent=1 // pred_region
      %s137 = ssub.s32 256, 256
      %138 = vsyncadd [#allocation4], %s137
      %s139 = sshll.u32 [#allocation5], 4
      %s140 = int_to_ptr.vmem [resolvable:$true] %s139
      %145 = dma.vmem_to_hbm [thread:$0]  %s140, 256, %s2, [#allocation4], 128, 128, 8
    $region17: #{tpu_custom_call.1} parent=1 // pred_fallthru
      _
    // Predicated region
    $region18: #{tpu_custom_call.1} parent=1 // pred_check
      _
    $region19: #{tpu_custom_call.1} parent=1 // pred_check_branch
      %147 = sbr.rel (0) target = $region21
    $region20: #{tpu_custom_call.1} parent=1 // pred_region
      %148 = dma.done [#allocation4], 256
    $region21: #{tpu_custom_call.1} parent=1 // pred_fallthru
      _
    %149 = vsyncpa [#allocation3], 1
    %150 = vsyncpa [#allocation4], 1

</llo_original>
